<compile_context>
chip_gen: v7x
topology: tpu7x:2x2x1
jax: 0.10.0
libtpu: 0.0.40
codegen_flags: <defaults>
</compile_context>

<pallas_src>
import functools

import jax
import jax.numpy as jnp
from jax.experimental import pallas as pl
from jax.experimental.pallas import tpu as pltpu


def _scaling_kernel(x_ref, scale_ref, y_ref, *, sign):
    """y = x * exp(sign * scale), scale row-broadcast over the batch tile."""
    scale = scale_ref[...].astype(jnp.float32)        # (1, block_d)
    factor = jnp.exp(sign * scale)                    # EUP transcendental, tiny
    y_ref[...] = (x_ref[...].astype(jnp.float32) * factor).astype(y_ref.dtype)


def _pick_tiles(B, D, itemsize):
    """Choose lane-dense / sublane-aligned tiles with ~2 MiB per tile."""
    # Feature axis: full D if modest, else a lane-dense 2048-lane chunk
    # (keeps per-tile footprint bounded independent of D; critical for v7x).
    block_d = D if D <= 2048 else 2048

    # Batch axis: ~2 MiB per tile => <= ~8 MiB for double-buffered in + out,
    # safe under the 16 MiB (v5e) / 32 MiB (v6e, v7x) scoped VMEM defaults.
    target_tile_bytes = 2 * 1024 * 1024
    rows = max(1, target_tile_bytes // (block_d * max(itemsize, 1)))
    if rows >= B:
        block_b = B                       # full batch fits in one tile
    else:
        block_b = max(8, (rows // 8) * 8)  # sublane-aligned (multiple of 8)
    return block_b, block_d


def scaling_forward(x, scale, reverse=False, block_b=None, block_d=None):
    """Pallas implementation of NICE Scaling.forward.

    Args:
      x: (B, D) input.
      scale: (1, D) log-scale parameter.
      reverse: inference mode (multiply by exp(-scale)) if True.
    Returns:
      (y, log_det_J) with y.shape == x.shape and log_det_J a scalar.
    """
    B, D = x.shape
    assert scale.shape == (1, D)
    sign = -1.0 if reverse else 1.0

    itemsize = jnp.dtype(x.dtype).itemsize
    auto_b, auto_d = _pick_tiles(B, D, itemsize)
    if block_b is None:
        block_b = auto_b
    if block_d is None:
        block_d = auto_d

    grid = (pl.cdiv(B, block_b), pl.cdiv(D, block_d))

    cost = pl.CostEstimate(
        flops=B * D,                                   # one multiply / element
        transcendentals=D,                             # exp over (1, D)
        bytes_accessed=2 * B * D * itemsize            # x read + y write
        + D * jnp.dtype(scale.dtype).itemsize,         # scale read
    )

    y = pl.pallas_call(
        functools.partial(_scaling_kernel, sign=sign),
        out_shape=jax.ShapeDtypeStruct((B, D), x.dtype),
        grid=grid,
        in_specs=[
            pl.BlockSpec((block_b, block_d), lambda i, j: (i, j)),  # x tile
            pl.BlockSpec((1, block_d), lambda i, j: (0, j)),        # scale (row-replicated)
        ],
        out_specs=pl.BlockSpec((block_b, block_d), lambda i, j: (i, j)),
        compiler_params=pltpu.CompilerParams(
            dimension_semantics=("parallel", "parallel")),  # megacore-friendly
        cost_estimate=cost,
    )(x, scale)

    # log-det of the Jacobian is just sum(scale); keep it in the wrapper so the
    # kernel has no shared output block (unlocks "parallel" grid semantics).
    log_det_J = jnp.sum(scale)
    return y, log_det_J


if __name__ == "__main__":
    key = jax.random.PRNGKey(0)
    kx, ks, kx2 = jax.random.split(key, 3)

    # --- Small shape consistent with the module (batch=8, dim=256) ---------
    B, D = 8, 256
    x = jax.random.normal(kx, (B, D), dtype=jnp.float32)

    # Module __init__ uses zeros((1, dim)); add a small deterministic nonzero
    # perturbation so the exp/broadcast path is actually exercised.
    scale = 0.05 * jax.random.normal(ks, (1, D), dtype=jnp.float32)

    y_fwd, ld_fwd = scaling_forward(x, scale, reverse=False)
    y_rev, ld_rev = scaling_forward(x, scale, reverse=True)
    jax.block_until_ready((y_fwd, ld_fwd, y_rev, ld_rev))

    ref_fwd = x * jnp.exp(scale)
    ref_rev = x * jnp.exp(-scale)
    ref_ld = jnp.sum(scale)

    assert jnp.allclose(y_fwd, ref_fwd, atol=1e-5, rtol=1e-5)
    assert jnp.allclose(y_rev, ref_rev, atol=1e-5, rtol=1e-5)
    assert jnp.allclose(ld_fwd, ref_ld, atol=1e-5, rtol=1e-5)
    assert jnp.allclose(ld_rev, ref_ld, atol=1e-5, rtol=1e-5)

    # --- Multi-tile / partial-edge-block path (non-divisible batch) --------
    B2, D2 = 1000, 384
    x2 = jax.random.normal(kx2, (B2, D2), dtype=jnp.float32)
    scale2 = 0.03 * jax.random.normal(ks, (1, D2), dtype=jnp.float32)
    y2, ld2 = scaling_forward(x2, scale2, reverse=False, block_b=128)
    jax.block_until_ready((y2, ld2))
    assert jnp.allclose(y2, x2 * jnp.exp(scale2), atol=1e-5, rtol=1e-5)
    assert jnp.allclose(ld2, jnp.sum(scale2), atol=1e-5, rtol=1e-5)

    print("KERNEL_OK")
</pallas_src>

<mosaic_0001>
module attributes {stable_mosaic.version = 11 : i64} {
  func.func @_scaling_kernel(%arg0: i32, %arg1: i32, %arg2: memref<8x256xf32, #tpu.memory_space<vmem>>, %arg3: memref<1x256xf32, #tpu.memory_space<vmem>>, %arg4: memref<8x256xf32, #tpu.memory_space<vmem>>) attributes {dimension_semantics = [#tpu.dimension_semantics<parallel>, #tpu.dimension_semantics<parallel>], iteration_bounds = array<i64: 1, 1>, scalar_prefetch = 0 : i64, scratch_operands = 0 : i64, tpu.core_type = #tpu.core_type<tc>, window_params = [{transform_indices = @transform_0, window_bounds = array<i64: 8, 256>}, {transform_indices = @transform_1, window_bounds = array<i64: 1, 256>}, {transform_indices = @transform_2, window_bounds = array<i64: 8, 256>}]} {
    %c0 = arith.constant 0 : index
    %c0_0 = arith.constant 0 : index
    %0 = vector.load %arg3[%c0, %c0_0] : memref<1x256xf32, #tpu.memory_space<vmem>>, vector<1x256xf32>
    %cst = arith.constant 1.000000e+00 : f32
    %1 = vector.broadcast %cst : f32 to vector<1x256xf32>
    %2 = arith.mulf %1, %0 : vector<1x256xf32>
    %3 = math.exp %2 : vector<1x256xf32>
    %c0_1 = arith.constant 0 : index
    %c0_2 = arith.constant 0 : index
    %4 = vector.load %arg2[%c0_1, %c0_2] : memref<8x256xf32, #tpu.memory_space<vmem>>, vector<8x256xf32>
    %5 = vector.broadcast %3 : vector<1x256xf32> to vector<8x256xf32>
    %6 = arith.mulf %4, %5 : vector<8x256xf32>
    %c0_3 = arith.constant 0 : index
    %c0_4 = arith.constant 0 : index
    %7 = vector.load %arg4[%c0_3, %c0_4] : memref<8x256xf32, #tpu.memory_space<vmem>>, vector<8x256xf32>
    tpu.vector_store %arg4[%c0_3, %c0_4], %6 {strides = array<i32>} : memref<8x256xf32, #tpu.memory_space<vmem>>, vector<8x256xf32>,
    return
  }
  func.func @transform_0(%arg0: i32, %arg1: i32) -> (i32, i32) {
    %c0_i32 = arith.constant 0 : i32
    return %arg0, %arg1 : i32, i32
  }
  func.func @transform_1(%arg0: i32, %arg1: i32) -> (i32, i32) {
    %c0_i32 = arith.constant 0 : i32
    %c0_i32_0 = arith.constant 0 : i32
    return %c0_i32, %arg1 : i32, i32
  }
  func.func @transform_2(%arg0: i32, %arg1: i32) -> (i32, i32) {
    %c0_i32 = arith.constant 0 : i32
    return %arg0, %arg1 : i32, i32
  }
}

</mosaic_0001>

<llo_original>
// kernel: tpu_custom_call.1
$region0: #{tpu_custom_call.1}
  #allocation0 [shape = 'u32[]', space=smem, size = 0x4, offset = 0x4, fixed_abs, tag = 'smem constant byte address 0x4 - core index']
  #allocation1 [shape = 'u32[144,128]{1,0:T(1,128)}', space=vmem, size = 0x12000, scoped, tag = 'internal scratch']
  %s0 = inlined_call_operand.hbm [shape: f32[8,256], index: 0, kind: input, shape index: {}]
  %s1 = inlined_call_operand.vmem [shape: f32[1,256], index: 1, kind: input, shape index: {}]
  %s2 = inlined_call_operand.hbm [shape: f32[8,256], index: 2, kind: output, shape index: {}]
  %s3 = sld [smem:[#allocation0]]
  $region22: #{tpu_custom_call.1} parent=0
    _
  %s5 = ssub.s32 1, %s3
  %s6 = scalar_select 0, %s5, %s3
  $region1: #{tpu_custom_call.1} parent=0
    #allocation2 [shape = 'u8[8192]{0}', space=vmem, size = 0x2000, scoped, tag = 'input window, operand 0, single buffered']
    #allocation3 [shape = 's32[1]{0}', space=sflag, size = 0x4, scoped, tag = 'scoped memory for tpu_custom_call.1']
    #allocation4 [shape = 's32[1]{0}', space=sflag, size = 0x4, scoped, tag = 'scoped memory for tpu_custom_call.1']
    #allocation5 [shape = 'u8[8192]{0}', space=vmem, size = 0x2000, scoped, tag = 'output window, operand 0, single buffered']
    %7 = vsyncpa [#allocation3], 0
    %8 = vsyncpa [#allocation4], 0
    // Predicated region
    $region2: #{tpu_custom_call.1} parent=1 // pred_check
      _
    $region3: #{tpu_custom_call.1} parent=1 // pred_check_branch
      %10 = sbr.rel (0) target = $region5
    $region4: #{tpu_custom_call.1} parent=1 // pred_region
      %s12 = ssub.s32 256, 256
      %13 = vsyncadd [#allocation3], %s12
      %s15 = sshll.u32 [#allocation2], 4
      %s16 = int_to_ptr.vmem [resolvable:$true] %s15
      %18 = dma.hbm_to_vmem [thread:$0]  %s0, 256, %s16, [#allocation3]
    $region5: #{tpu_custom_call.1} parent=1 // pred_fallthru
      _
    // Predicated region
    $region6: #{tpu_custom_call.1} parent=1 // pred_check
      _
    $region7: #{tpu_custom_call.1} parent=1 // pred_check_branch
      %20 = sbr.rel (0) target = $region9
    $region8: #{tpu_custom_call.1} parent=1 // pred_region
      _
    $region9: #{tpu_custom_call.1} parent=1 // pred_fallthru
      _
    // Predicated region
    $region10: #{tpu_custom_call.1} parent=1 // pred_check
      _
    $region11: #{tpu_custom_call.1} parent=1 // pred_check_branch
      %22 = sbr.rel (0) target = $region13
    $region12: #{tpu_custom_call.1} parent=1 // pred_region
      %23 = dma.done [#allocation3], 256
    $region13: #{tpu_custom_call.1} parent=1 // pred_fallthru
      _
    %v24 = vld [vmem:[%s1] sm:$0x3]
    %v25 = vmul.f32 %v24, 1.442695
    %v26 = vpow.pop %v25
    %v27 = vld [vmem:[#allocation2] sm:$0xff]
    %v28 = vld [vmem:[#allocation2 + $0x8] sm:$0xff]
    %v30 = vlaneseq
    %v31 = vshrl.u32 %v30, 7
    %v32 = vsub.s32 0, %v31
    %v33 = vrot.slane %v26, %v32
    %v34 = vlaneseq
    %v35 = vshrl.u32 %v34, 7
    %v36 = vsub.s32 1, %v35
    %v37 = vrot.slane %v26, %v36
    %v40 = vmul.f32 %v27, %v33
    %v41 = vmul.f32 %v28, %v37
    %42 = vst [vmem:[#allocation5] sm:$0xff] %v40
    %43 = vst [vmem:[#allocation5 + $0x8] sm:$0xff] %v41
    // Predicated region
    $region14: #{tpu_custom_call.1} parent=1 // pred_check
      _
    $region15: #{tpu_custom_call.1} parent=1 // pred_check_branch
      %45 = sbr.rel (0) target = $region17
    $region16: #{tpu_custom_call.1} parent=1 // pred_region
      %s47 = ssub.s32 256, 256
      %48 = vsyncadd [#allocation4], %s47
      %s50 = sshll.u32 [#allocation5], 4
      %s51 = int_to_ptr.vmem [resolvable:$true] %s50
      %53 = dma.vmem_to_hbm [thread:$0]  %s51, 256, %s2, [#allocation4]
    $region17: #{tpu_custom_call.1} parent=1 // pred_fallthru
      _
    // Predicated region
    $region18: #{tpu_custom_call.1} parent=1 // pred_check
      _
    $region19: #{tpu_custom_call.1} parent=1 // pred_check_branch
      %55 = sbr.rel (0) target = $region21
    $region20: #{tpu_custom_call.1} parent=1 // pred_region
      %56 = dma.done [#allocation4], 256
    $region21: #{tpu_custom_call.1} parent=1 // pred_fallthru
      _
    %57 = vsyncpa [#allocation3], 1
    %58 = vsyncpa [#allocation4], 1

</llo_original>
